<compile_context>
chip_gen: v7x
topology: tpu7x:2x2x1
jax: 0.10.0
libtpu: 0.0.40
codegen_flags: <defaults>
</compile_context>

<pallas_src>
import jax
import jax.numpy as jnp
from jax.experimental import pallas as pl
from jax.experimental.pallas import tpu as pltpu

# ----------------------------- dimensions ---------------------------------
N_FRAMES = 256         # mel frames
FRAME_LEN = 256        # samples per analysis frame
HOP = FRAME_LEN        # vocoder upsample factor (samples per frame)
N_MELS = 128           # mel channels (lane-dense)
T_AUDIO = N_FRAMES * FRAME_LEN
N_SPEAKERS = 4
TILE_F = 128           # frame rows per grid step -> MXU-filling M-dim and
                       # >= 2 grid steps so v7x's two TensorCores both work

# Exact constants from Tracer.forward:  c = (clip(x,-1,1)+1)/2*(a0+a1) - a1
# With x = tanh(.) in [-1,1] the clip is a no-op, so c = A*x + B with:
_A = (2.0957 + 11.5129) / 2.0
_B = _A - 11.5129


# ------------------------------ fused kernel --------------------------------
def tracer_fused_kernel(frames_ref,      # [TILE_F, FRAME_LEN]  f32
                        basis_ref,       # [FRAME_LEN, N_MELS]  bf16
                        w_eff_ref,       # [N_MELS, N_MELS]     bf16 (folded)
                        spk_emb_ref,     # [1, N_MELS]          f32 (pre-gathered)
                        w_voc_ref,       # [N_MELS, HOP]        bf16 (A folded in)
                        b_voc_ref,       # [1, HOP]             f32 (B folded in)
                        audio_ref):      # [TILE_F, HOP]        f32 out
    # --- generator.mel_generator: filterbank projection + log compression ---
    # f32 frames arrive straight from HBM; bf16 cast happens here (free VPU
    # filler) instead of as a separate wrapper-side XLA pass over the audio.
    spec = jnp.dot(frames_ref[...].astype(jnp.bfloat16), basis_ref[...],
                   preferred_element_type=jnp.float32)          # [F, n_mels]
    features = jnp.log(jnp.abs(spec) + 1.0)                     # VPU/EUP, f32

    # --- variance predictors + generator (rank-1 conditioning folded) -------
    h = jnp.dot(features.astype(jnp.bfloat16), w_eff_ref[...],
                preferred_element_type=jnp.float32)             # [F, n_mels]
    conversions = jnp.tanh(h + spk_emb_ref[...])                # speaker cond.

    # --- Tracer.forward clamp/rescale + vocoder --------------------------------
    # clamp is a no-op after tanh; the affine (A*x + B) is folded into
    # w_voc_ref (A*w_voc) and b_voc_ref (B*colsum(w_voc)) at trace time.
    audio_ref[...] = jnp.tanh(
        jnp.dot(conversions.astype(jnp.bfloat16), w_voc_ref[...],
                preferred_element_type=jnp.float32) + b_voc_ref[...])


# ------------------------------- forward ------------------------------------
def tracer_forward(audios, speakers, params):
    # glue: framing (equivalent of audios.unsqueeze(0) + STFT framing).
    # NOTE: kept f32 -- no wrapper-side dtype cast pass over the waveform.
    frames = audios.reshape(N_FRAMES, FRAME_LEN)

    # fold variance heads + f0/e projections into the generator weight once:
    #   h = f@w_gen + (f@w_f0)@w_f0_proj + (f@w_e)@w_e_proj = f@w_eff
    w_eff = (params["w_gen"]
             + params["w_f0"] @ params["w_f0_proj"]
             + params["w_e"] @ params["w_e_proj"]).astype(jnp.bfloat16)
    basis = params["mel_basis"].astype(jnp.bfloat16)

    # fold the clamp/rescale affine into the vocoder weight + bias.
    w_voc_eff = (_A * params["w_voc"]).astype(jnp.bfloat16)          # [128, HOP]
    b_voc = _B * jnp.sum(params["w_voc"], axis=0, keepdims=True)     # [1, HOP] f32

    # speaker embedding gathered in the wrapper (tiny); no scalar prefetch.
    spk_emb = jnp.take(params["spk_table"], speakers.astype(jnp.int32).reshape(-1)[:1],
                       axis=0)                                        # [1, N_MELS] f32

    n_tiles = pl.cdiv(N_FRAMES, TILE_F)
    grid_spec = pl.GridSpec(
        grid=(n_tiles,),
        in_specs=[
            pl.BlockSpec((TILE_F, FRAME_LEN),  lambda i: (i, 0)),   # frames (f32)
            pl.BlockSpec((FRAME_LEN, N_MELS),  lambda i: (0, 0)),   # basis
            pl.BlockSpec((N_MELS, N_MELS),     lambda i: (0, 0)),   # w_eff
            pl.BlockSpec((1, N_MELS),          lambda i: (0, 0)),   # spk emb row
            pl.BlockSpec((N_MELS, HOP),        lambda i: (0, 0)),   # w_voc_eff
            pl.BlockSpec((1, HOP),             lambda i: (0, 0)),   # b_voc
        ],
        out_specs=pl.BlockSpec((TILE_F, HOP), lambda i: (i, 0)),
    )

    audio_frames = pl.pallas_call(
        tracer_fused_kernel,
        grid_spec=grid_spec,
        out_shape=jax.ShapeDtypeStruct((N_FRAMES, HOP), jnp.float32),
        compiler_params=pltpu.CompilerParams(
            dimension_semantics=("parallel",)),   # shards frame tiles across v7x TCs
    )(frames, basis, w_eff, spk_emb, w_voc_eff, b_voc)

    # glue: overlap-free synthesis -> [1, T_audio]
    return audio_frames.reshape(1, T_AUDIO)


# ------------------------------- params -------------------------------------
def init_params():
    keys = jax.random.split(jax.random.PRNGKey(42), 8)
    s = 0.05
    return {
        "mel_basis": s * jax.random.normal(keys[0], (FRAME_LEN, N_MELS), jnp.float32),
        "w_f0":      s * jax.random.normal(keys[1], (N_MELS, 1), jnp.float32),
        "w_e":       s * jax.random.normal(keys[2], (N_MELS, 1), jnp.float32),
        "spk_table": s * jax.random.normal(keys[3], (N_SPEAKERS, N_MELS), jnp.float32),
        "w_gen":     s * jax.random.normal(keys[4], (N_MELS, N_MELS), jnp.float32),
        "w_f0_proj": s * jax.random.normal(keys[5], (1, N_MELS), jnp.float32),
        "w_e_proj":  s * jax.random.normal(keys[6], (1, N_MELS), jnp.float32),
        "w_voc":     s * jax.random.normal(keys[7], (N_MELS, HOP), jnp.float32),
    }


# TODO(synk): real Generator / Variance_Predictors / vocoder architectures are
# not defined in the provided source; synthetic linear equivalents are used,
# which is also what makes the rank-1 conditioning fold into w_eff valid.

if __name__ == "__main__":
    params = init_params()
    key = jax.random.PRNGKey(0)
    audios = jax.random.normal(key, (T_AUDIO,), jnp.float32)    # raw waveform
    speakers = jnp.array([1], dtype=jnp.int32)                  # speaker id

    out = jax.jit(lambda a, s: tracer_forward(a, s, params))(audios, speakers)
    jax.block_until_ready(out)
    assert out.shape == (1, T_AUDIO) and out.dtype == jnp.float32
    assert bool(jnp.all(jnp.isfinite(out)))
    print("KERNEL_OK")
</pallas_src>

<mosaic_0001>
module attributes {stable_mosaic.version = 11 : i64} {
  func.func @tracer_fused_kernel(%arg0: i32, %arg1: memref<128x256xf32, #tpu.memory_space<vmem>>, %arg2: memref<256x128xbf16, #tpu.memory_space<vmem>>, %arg3: memref<128x128xbf16, #tpu.memory_space<vmem>>, %arg4: memref<1x128xf32, #tpu.memory_space<vmem>>, %arg5: memref<128x256xbf16, #tpu.memory_space<vmem>>, %arg6: memref<1x256xf32, #tpu.memory_space<vmem>>, %arg7: memref<128x256xf32, #tpu.memory_space<vmem>>) attributes {dimension_semantics = [#tpu.dimension_semantics<parallel>], iteration_bounds = array<i64: 2>, scalar_prefetch = 0 : i64, scratch_operands = 0 : i64, tpu.core_type = #tpu.core_type<tc>, window_params = [{transform_indices = @transform_0, window_bounds = array<i64: 128, 256>}, {pipeline_mode = #tpu.pipeline_mode<synchronous>, transform_indices = @transform_1, window_bounds = array<i64: 256, 128>}, {pipeline_mode = #tpu.pipeline_mode<synchronous>, transform_indices = @transform_2, window_bounds = array<i64: 128, 128>}, {pipeline_mode = #tpu.pipeline_mode<synchronous>, transform_indices = @transform_3, window_bounds = array<i64: 1, 128>}, {pipeline_mode = #tpu.pipeline_mode<synchronous>, transform_indices = @transform_4, window_bounds = array<i64: 128, 256>}, {pipeline_mode = #tpu.pipeline_mode<synchronous>, transform_indices = @transform_5, window_bounds = array<i64: 1, 256>}, {transform_indices = @transform_6, window_bounds = array<i64: 128, 256>}]} {
    %c0 = arith.constant 0 : index
    %c0_0 = arith.constant 0 : index
    %0 = vector.load %arg1[%c0, %c0_0] : memref<128x256xf32, #tpu.memory_space<vmem>>, vector<128x256xf32>
    %1 = arith.truncf %0 : vector<128x256xf32> to vector<128x256xbf16>
    %c0_1 = arith.constant 0 : index
    %c0_2 = arith.constant 0 : index
    %2 = vector.load %arg2[%c0_1, %c0_2] : memref<256x128xbf16, #tpu.memory_space<vmem>>, vector<256x128xbf16>
    %cst = arith.constant dense<0.000000e+00> : vector<128x128xf32>
    %3 = tpu.matmul %1, %2, %cst {dimension_numbers = #tpu.dot_dimension_numbers<[1], [0], [0], [1], [0, 0, 1, 1], [], []>} : vector<128x256xbf16>, vector<256x128xbf16>, vector<128x128xf32> -> vector<128x128xf32>
    %4 = math.absf %3 : vector<128x128xf32>
    %cst_3 = arith.constant 1.000000e+00 : f32
    %5 = vector.broadcast %cst_3 : f32 to vector<128x128xf32>
    %6 = arith.addf %4, %5 : vector<128x128xf32>
    %7 = math.log %6 : vector<128x128xf32>
    %8 = arith.truncf %7 : vector<128x128xf32> to vector<128x128xbf16>
    %c0_4 = arith.constant 0 : index
    %c0_5 = arith.constant 0 : index
    %9 = vector.load %arg3[%c0_4, %c0_5] : memref<128x128xbf16, #tpu.memory_space<vmem>>, vector<128x128xbf16>
    %cst_6 = arith.constant dense<0.000000e+00> : vector<128x128xf32>
    %10 = tpu.matmul %8, %9, %cst_6 {dimension_numbers = #tpu.dot_dimension_numbers<[1], [0], [0], [1], [0, 0, 1, 1], [], []>} : vector<128x128xbf16>, vector<128x128xbf16>, vector<128x128xf32> -> vector<128x128xf32>
    %c0_7 = arith.constant 0 : index
    %c0_8 = arith.constant 0 : index
    %11 = vector.load %arg4[%c0_7, %c0_8] : memref<1x128xf32, #tpu.memory_space<vmem>>, vector<1x128xf32>
    %12 = vector.broadcast %11 : vector<1x128xf32> to vector<128x128xf32>
    %13 = arith.addf %10, %12 : vector<128x128xf32>
    %14 = math.tanh %13 : vector<128x128xf32>
    %15 = arith.truncf %14 : vector<128x128xf32> to vector<128x128xbf16>
    %c0_9 = arith.constant 0 : index
    %c0_10 = arith.constant 0 : index
    %16 = vector.load %arg5[%c0_9, %c0_10] : memref<128x256xbf16, #tpu.memory_space<vmem>>, vector<128x256xbf16>
    %cst_11 = arith.constant dense<0.000000e+00> : vector<128x256xf32>
    %17 = tpu.matmul %15, %16, %cst_11 {dimension_numbers = #tpu.dot_dimension_numbers<[1], [0], [0], [1], [0, 0, 1, 1], [], []>} : vector<128x128xbf16>, vector<128x256xbf16>, vector<128x256xf32> -> vector<128x256xf32>
    %c0_12 = arith.constant 0 : index
    %c0_13 = arith.constant 0 : index
    %18 = vector.load %arg6[%c0_12, %c0_13] : memref<1x256xf32, #tpu.memory_space<vmem>>, vector<1x256xf32>
    %19 = vector.broadcast %18 : vector<1x256xf32> to vector<128x256xf32>
    %20 = arith.addf %17, %19 : vector<128x256xf32>
    %21 = math.tanh %20 : vector<128x256xf32>
    %c0_14 = arith.constant 0 : index
    %c0_15 = arith.constant 0 : index
    %22 = vector.load %arg7[%c0_14, %c0_15] : memref<128x256xf32, #tpu.memory_space<vmem>>, vector<128x256xf32>
    tpu.vector_store %arg7[%c0_14, %c0_15], %21 {strides = array<i32>} : memref<128x256xf32, #tpu.memory_space<vmem>>, vector<128x256xf32>,
    return
  }
  func.func @transform_0(%arg0: i32) -> (i32, i32) {
    %c0_i32 = arith.constant 0 : i32
    %c0_i32_0 = arith.constant 0 : i32
    return %arg0, %c0_i32 : i32, i32
  }
  func.func @transform_1(%arg0: i32) -> (i32, i32) {
    %c0_i32 = arith.constant 0 : i32
    %c0_i32_0 = arith.constant 0 : i32
    %c0_i32_1 = arith.constant 0 : i32
    return %c0_i32, %c0_i32_0 : i32, i32
  }
  func.func @transform_2(%arg0: i32) -> (i32, i32) {
    %c0_i32 = arith.constant 0 : i32
    %c0_i32_0 = arith.constant 0 : i32
    %c0_i32_1 = arith.constant 0 : i32
    return %c0_i32, %c0_i32_0 : i32, i32
  }
  func.func @transform_3(%arg0: i32) -> (i32, i32) {
    %c0_i32 = arith.constant 0 : i32
    %c0_i32_0 = arith.constant 0 : i32
    %c0_i32_1 = arith.constant 0 : i32
    return %c0_i32, %c0_i32_0 : i32, i32
  }
  func.func @transform_4(%arg0: i32) -> (i32, i32) {
    %c0_i32 = arith.constant 0 : i32
    %c0_i32_0 = arith.constant 0 : i32
    %c0_i32_1 = arith.constant 0 : i32
    return %c0_i32, %c0_i32_0 : i32, i32
  }
  func.func @transform_5(%arg0: i32) -> (i32, i32) {
    %c0_i32 = arith.constant 0 : i32
    %c0_i32_0 = arith.constant 0 : i32
    %c0_i32_1 = arith.constant 0 : i32
    return %c0_i32, %c0_i32_0 : i32, i32
  }
  func.func @transform_6(%arg0: i32) -> (i32, i32) {
    %c0_i32 = arith.constant 0 : i32
    %c0_i32_0 = arith.constant 0 : i32
    return %arg0, %c0_i32 : i32, i32
  }
}

</mosaic_0001>

<llo_original>
// kernel: _lambda_.1
$region0: #{_lambda_.1}
  #allocation0 [shape = 'u32[]', space=smem, size = 0x4, offset = 0x4, fixed_abs, tag = 'smem constant byte address 0x4 - core index']
  #allocation1 [shape = 'u32[144,128]{1,0:T(1,128)}', space=vmem, size = 0x12000, scoped, tag = 'internal scratch']
  %s0 = inlined_call_operand.vmem [shape: f32[256,256], index: 0, kind: input, shape index: {}]
  %s1 = inlined_call_operand.vmem [shape: bf16[256,128], index: 1, kind: input, shape index: {}]
  %s2 = inlined_call_operand.vmem [shape: bf16[128,128], index: 2, kind: input, shape index: {}]
  %s3 = inlined_call_operand.vmem [shape: f32[1,128], index: 3, kind: input, shape index: {}]
  %s4 = inlined_call_operand.vmem [shape: bf16[128,256], index: 4, kind: input, shape index: {}]
  %s5 = inlined_call_operand.vmem [shape: f32[1,256], index: 5, kind: input, shape index: {}]
  %s6 = inlined_call_operand.vmem [shape: f32[256,256], index: 6, kind: output, shape index: {}]
  %s7 = sld [smem:[#allocation0]]
  $region57: #{_lambda_.1} parent=0
    _
  %s9 = ssub.s32 1, %s7
  %s10 = scalar_select 0, %s9, %s7
  loop: start=0, step=1, limit=4
  $region2: #{_lambda_.1} parent=0 // loop_pre_header
    _
  $region3: #{_lambda_.1} parent=0 // loop_header
    %s12 = sphi 0, %s16
    %p13 = scmp.ge.s32.totalorder %s12, 4
    %s22 = sphi 0, %s24
    %s25 = sphi 0, %s22
    %s26 = sphi 0, %s25
    %s42 = sphi 0, %s26
    %s46 = sphi 0, %s46
    %s48 = sphi 0, %s46
    %s49 = sphi 0, %s48
    %s63 = sphi 0, %s49
    %s67 = sphi 0, %s67
    %s69 = sphi 0, %s67
    %s70 = sphi 0, %s69
    %s84 = sphi 0, %s70
    %s88 = sphi 0, %s88
    %s90 = sphi 0, %s88
    %s91 = sphi 0, %s90
    %s105 = sphi 0, %s91
    %s109 = sphi 0, %s109
    %s111 = sphi 0, %s109
    %s112 = sphi 0, %s111
    %s126 = sphi 0, %s112
    %s130 = sphi 0, %s130
    %s132 = sphi 0, %s130
    %s133 = sphi 0, %s132
    %s147 = sphi 0, %s133
    %s153 = sphi 0, %s155
    %s156 = sphi 0, %s153
    %s157 = sphi 0, %s156
    %s173 = sphi 0, %s157
  $region4: #{_lambda_.1} parent=0 // loop_header_branch
    %15 = sbr.rel (%p13) target = $region8
  $region5: #{_lambda_.1} parent=0 // loop_body
    %s17 = ssub.s32 %s12, 1
    %s18 = ssub.s32 %s12, 2
    %s19 = sadd.s32 %s12, 1
    %s20 = ssub.s32 %s12, %s19
    %p21 = scmp.eq.s32.totalorder %s20, 0
    %s23 = sadd.s32 %s22, 1
    %s24 = scalar_select %p21, %s22, %s23
    %p27 = pneg %p21
    %p28 = scmp.eq.s32.totalorder %s12, 1
    %p29 = por %p27, %p28
    %p30 = scmp.ne.s32.totalorder %s22, %s25
    %p31 = scmp.eq.s32.totalorder %s12, 0
    %p32 = por %p30, %p31
    %p33 = scmp.ne.s32.totalorder %s22, %s25
    %p34 = scmp.eq.s32.totalorder %s17, 1
    %p35 = por %p33, %p34
    %p36 = scmp.ne.s32.totalorder %s25, %s26
    %p37 = scmp.eq.s32.totalorder %s17, 0
    %p38 = por %p36, %p37
    %p39 = scmp.ne.s32.totalorder %s25, %s26
    %p40 = scmp.eq.s32.totalorder %s18, 1
    %p41 = por %p39, %p40
    %p43 = scmp.ne.s32.totalorder %s26, %s42
    %p44 = scmp.eq.s32.totalorder %s18, 0
    %p45 = por %p43, %p44
    %s47 = sadd.s32 %s46, 1
    %p50 = scmp.eq.s32.totalorder %s12, 1
    %p51 = scmp.ne.s32.totalorder %s46, %s48
    %p52 = scmp.eq.s32.totalorder %s12, 0
    %p53 = por %p51, %p52
    %p54 = scmp.ne.s32.totalorder %s46, %s48
    %p55 = scmp.eq.s32.totalorder %s17, 1
    %p56 = por %p54, %p55
    %p57 = scmp.ne.s32.totalorder %s48, %s49
    %p58 = scmp.eq.s32.totalorder %s17, 0
    %p59 = por %p57, %p58
    %p60 = scmp.ne.s32.totalorder %s48, %s49
    %p61 = scmp.eq.s32.totalorder %s18, 1
    %p62 = por %p60, %p61
    %p64 = scmp.ne.s32.totalorder %s49, %s63
    %p65 = scmp.eq.s32.totalorder %s18, 0
    %p66 = por %p64, %p65
    %s68 = sadd.s32 %s67, 1
    %p71 = scmp.eq.s32.totalorder %s12, 1
    %p72 = scmp.ne.s32.totalorder %s67, %s69
    %p73 = scmp.eq.s32.totalorder %s12, 0
    %p74 = por %p72, %p73
    %p75 = scmp.ne.s32.totalorder %s67, %s69
    %p76 = scmp.eq.s32.totalorder %s17, 1
    %p77 = por %p75, %p76
    %p78 = scmp.ne.s32.totalorder %s69, %s70
    %p79 = scmp.eq.s32.totalorder %s17, 0
    %p80 = por %p78, %p79
    %p81 = scmp.ne.s32.totalorder %s69, %s70
    %p82 = scmp.eq.s32.totalorder %s18, 1
    %p83 = por %p81, %p82
    %p85 = scmp.ne.s32.totalorder %s70, %s84
    %p86 = scmp.eq.s32.totalorder %s18, 0
    %p87 = por %p85, %p86
    %s89 = sadd.s32 %s88, 1
    %p92 = scmp.eq.s32.totalorder %s12, 1
    %p93 = scmp.ne.s32.totalorder %s88, %s90
    %p94 = scmp.eq.s32.totalorder %s12, 0
    %p95 = por %p93, %p94
    %p96 = scmp.ne.s32.totalorder %s88, %s90
    %p97 = scmp.eq.s32.totalorder %s17, 1
    %p98 = por %p96, %p97
    %p99 = scmp.ne.s32.totalorder %s90, %s91
    %p100 = scmp.eq.s32.totalorder %s17, 0
    %p101 = por %p99, %p100
    %p102 = scmp.ne.s32.totalorder %s90, %s91
    %p103 = scmp.eq.s32.totalorder %s18, 1
    %p104 = por %p102, %p103
    %p106 = scmp.ne.s32.totalorder %s91, %s105
    %p107 = scmp.eq.s32.totalorder %s18, 0
    %p108 = por %p106, %p107
    %s110 = sadd.s32 %s109, 1
    %p113 = scmp.eq.s32.totalorder %s12, 1
    %p114 = scmp.ne.s32.totalorder %s109, %s111
    %p115 = scmp.eq.s32.totalorder %s12, 0
    %p116 = por %p114, %p115
    %p117 = scmp.ne.s32.totalorder %s109, %s111
    %p118 = scmp.eq.s32.totalorder %s17, 1
    %p119 = por %p117, %p118
    %p120 = scmp.ne.s32.totalorder %s111, %s112
    %p121 = scmp.eq.s32.totalorder %s17, 0
    %p122 = por %p120, %p121
    %p123 = scmp.ne.s32.totalorder %s111, %s112
    %p124 = scmp.eq.s32.totalorder %s18, 1
    %p125 = por %p123, %p124
    %p127 = scmp.ne.s32.totalorder %s112, %s126
    %p128 = scmp.eq.s32.totalorder %s18, 0
    %p129 = por %p127, %p128
    %s131 = sadd.s32 %s130, 1
    %p134 = scmp.eq.s32.totalorder %s12, 1
    %p135 = scmp.ne.s32.totalorder %s130, %s132
    %p136 = scmp.eq.s32.totalorder %s12, 0
    %p137 = por %p135, %p136
    %p138 = scmp.ne.s32.totalorder %s130, %s132
    %p139 = scmp.eq.s32.totalorder %s17, 1
    %p140 = por %p138, %p139
    %p141 = scmp.ne.s32.totalorder %s132, %s133
    %p142 = scmp.eq.s32.totalorder %s17, 0
    %p143 = por %p141, %p142
    %p144 = scmp.ne.s32.totalorder %s132, %s133
    %p145 = scmp.eq.s32.totalorder %s18, 1
    %p146 = por %p144, %p145
    %p148 = scmp.ne.s32.totalorder %s133, %s147
    %p149 = scmp.eq.s32.totalorder %s18, 0
    %p150 = por %p148, %p149
    %s151 = ssub.s32 %s12, %s19
    %p152 = scmp.eq.s32.totalorder %s151, 0
    %s154 = sadd.s32 %s153, 1
    %s155 = scalar_select %p152, %s153, %s154
    %p158 = pneg %p152
    %p159 = scmp.eq.s32.totalorder %s12, 1
    %p160 = por %p158, %p159
    %p161 = scmp.ne.s32.totalorder %s153, %s156
    %p162 = scmp.eq.s32.totalorder %s12, 0
    %p163 = por %p161, %p162
    %p164 = scmp.ne.s32.totalorder %s153, %s156
    %p165 = scmp.eq.s32.totalorder %s17, 1
    %p166 = por %p164, %p165
    %p167 = scmp.ne.s32.totalorder %s156, %s157
    %p168 = scmp.eq.s32.totalorder %s17, 0
    %p169 = por %p167, %p168
    %p170 = scmp.ne.s32.totalorder %s156, %s157
    %p171 = scmp.eq.s32.totalorder %s18, 1
    %p172 = por %p170, %p171
    %p174 = scmp.ne.s32.totalorder %s157, %s173
    %p175 = scmp.eq.s32.totalorder %s18, 0
    %p176 = por %p174, %p175
    %p177 = scmp.le.s32.totalorder 1, %s12
    %p178 = scmp.lt.s32.totalorder %s12, 3
    %p179 = pnand %p177, %p178
    %p180 = pneg %p179
    // Predicated region
    $region9: #{_lambda_.1} parent=5 // pred_check
      _
    $region10: #{_lambda_.1} parent=5 // pred_check_branch
      %182 = sbr.rel (%p179) target = $region12
    $region11: #{_lambda_.1} parent=5 // pred_region
      %s183 = ssub.s32 %s12, 1
      // Predicated region
      $region13: #{_lambda_.1} parent=11 // pred_check
        %p184 = pneg %p59
      $region14: #{_lambda_.1} parent=11 // pred_check_branch
        %186 = sbr.rel (%p184) target = $region16
      $region15: #{_lambda_.1} parent=11 // pred_region
        _
      $region16: #{_lambda_.1} parent=11 // pred_fallthru
        _
      // Predicated region
      $region17: #{_lambda_.1} parent=11 // pred_check
        %p187 = pneg %p80
      $region18: #{_lambda_.1} parent=11 // pred_check_branch
        %189 = sbr.rel (%p187) target = $region20
      $region19: #{_lambda_.1} parent=11 // pred_region
        _
      $region20: #{_lambda_.1} parent=11 // pred_fallthru
        _
      // Predicated region
      $region21: #{_lambda_.1} parent=11 // pred_check
        %p190 = pneg %p101
      $region22: #{_lambda_.1} parent=11 // pred_check_branch
        %192 = sbr.rel (%p190) target = $region24
      $region23: #{_lambda_.1} parent=11 // pred_region
        _
      $region24: #{_lambda_.1} parent=11 // pred_fallthru
        _
      // Predicated region
      $region25: #{_lambda_.1} parent=11 // pred_check
        %p193 = pneg %p122
      $region26: #{_lambda_.1} parent=11 // pred_check_branch
        %195 = sbr.rel (%p193) target = $region28
      $region27: #{_lambda_.1} parent=11 // pred_region
        _
      $region28: #{_lambda_.1} parent=11 // pred_fallthru
        _
      // Predicated region
      $region29: #{_lambda_.1} parent=11 // pred_check
        %p196 = pneg %p143
      $region30: #{_lambda_.1} parent=11 // pred_check_branch
        %198 = sbr.rel (%p196) target = $region32
      $region31: #{_lambda_.1} parent=11 // pred_region
        _
      $region32: #{_lambda_.1} parent=11 // pred_fallthru
        _
    $region12: #{_lambda_.1} parent=5 // pred_fallthru
      _
    %p199 = scmp.lt.s32.totalorder %s12, 2
    // Predicated region
    $region33: #{_lambda_.1} parent=5 // pred_check
      %p200 = pneg %p199
    $region34: #{_lambda_.1} parent=5 // pred_check_branch
      %202 = sbr.rel (%p200) target = $region36
    $region35: #{_lambda_.1} parent=5 // pred_region
      // Predicated region
      $region37: #{_lambda_.1} parent=35 // pred_check
        %p203 = pneg %p32
      $region38: #{_lambda_.1} parent=35 // pred_check_branch
        %205 = sbr.rel (%p203) target = $region40
      $region39: #{_lambda_.1} parent=35 // pred_region
        %s206 = smul.u32 16, %s12
        %p207 = scmp.lt.s32.totalorder %s206, 31
        %s208 = scalar_select %p207, %s206, 31
        %s209 = smul.addr %s208, 2
        %s210 = smul.addr %s209, 8
        %s211 = scalar_lea.vmem %s0, %s210
        %s212 = smul.u32 16, %s12
      $region40: #{_lambda_.1} parent=35 // pred_fallthru
        _
    $region36: #{_lambda_.1} parent=5 // pred_fallthru
      _
    %p213 = scmp.le.s32.totalorder 1, %s12
    %p214 = scmp.lt.s32.totalorder %s12, 3
    %p215 = pnand %p213, %p214
    %p216 = pneg %p215
    // Predicated region
    $region41: #{_lambda_.1} parent=5 // pred_check
      _
    $region42: #{_lambda_.1} parent=5 // pred_check_branch
      %218 = sbr.rel (%p215) target = $region44
    $region43: #{_lambda_.1} parent=5 // pred_region
      %s219 = ssub.s32 %s12, 1
      %s220 = smul.u32 16, %s17
      %p221 = scmp.lt.s32.totalorder %s220, 31
      %s222 = scalar_select %p221, %s220, 31
      %s223 = smul.addr %s222, 2
      %s224 = smul.addr %s223, 8
      %s225 = scalar_lea.vmem %s0, %s224
      %p226 = pneg %p38
      %p227 = pneg %p35
      %p228 = pneg %p59
      %p229 = pneg %p56
      %p230 = pneg %p80
      %p231 = pneg %p77
      %p232 = pneg %p101
      %p233 = pneg %p98
      %p234 = pneg %p122
      %p235 = pneg %p119
      %p236 = pneg %p143
      %p237 = pneg %p140
      %p238 = pneg %p169
      %p239 = pneg %p166
      %s240 = smul.u32 16, %s17
      %p241 = scmp.lt.s32.totalorder %s240, 31
      %s242 = scalar_select %p241, %s240, 31
      %s243 = smul.addr %s242, 2
      %s244 = smul.addr %s243, 8
      %s245 = scalar_lea.vmem %s6, %s244
      %s246 = smul.u32 16, %s17
      %p247 = scmp.lt.s32.totalorder %s246, 31
      %s248 = scalar_select %p247, %s246, 31
      %s249 = smul.addr %s248, 2
      %s250 = smul.addr %s249, 8
      %s251 = scalar_lea.vmem %s0, %s250
      %s252 = smul.u32 16, %s17
      %s253 = smul.u32 16, %s17
      %p254 = scmp.lt.s32.totalorder %s253, 31
      %s255 = scalar_select %p254, %s253, 31
      %s256 = smul.addr %s255, 2
      %s257 = smul.addr %s256, 8
      %s258 = scalar_lea.vmem %s6, %s257
      %s259 = smul.u32 16, %s17
      %v261 = vld [vmem:[%s251] sm:$0xff]
      %v262 = vld [vmem:[%s251 + $0x8] sm:$0xff]
      %v263 = vld [vmem:[%s251 + $0x10] sm:$0xff]
      %v264 = vld [vmem:[%s251 + $0x18] sm:$0xff]
      %v265 = vld [vmem:[%s251 + $0x20] sm:$0xff]
      %v266 = vld [vmem:[%s251 + $0x28] sm:$0xff]
      %v267 = vld [vmem:[%s251 + $0x30] sm:$0xff]
      %v268 = vld [vmem:[%s251 + $0x38] sm:$0xff]
      %v269 = vld [vmem:[%s251 + $0x40] sm:$0xff]
      %v270 = vld [vmem:[%s251 + $0x48] sm:$0xff]
      %v271 = vld [vmem:[%s251 + $0x50] sm:$0xff]
      %v272 = vld [vmem:[%s251 + $0x58] sm:$0xff]
      %v273 = vld [vmem:[%s251 + $0x60] sm:$0xff]
      %v274 = vld [vmem:[%s251 + $0x68] sm:$0xff]
      %v275 = vld [vmem:[%s251 + $0x70] sm:$0xff]
      %v276 = vld [vmem:[%s251 + $0x78] sm:$0xff]
      %v277 = vld [vmem:[%s251 + $0x80] sm:$0xff]
      %v278 = vld [vmem:[%s251 + $0x88] sm:$0xff]
      %v279 = vld [vmem:[%s251 + $0x90] sm:$0xff]
      %v280 = vld [vmem:[%s251 + $0x98] sm:$0xff]
      %v281 = vld [vmem:[%s251 + $0xa0] sm:$0xff]
      %v282 = vld [vmem:[%s251 + $0xa8] sm:$0xff]
      %v283 = vld [vmem:[%s251 + $0xb0] sm:$0xff]
      %v284 = vld [vmem:[%s251 + $0xb8] sm:$0xff]
      %v285 = vld [vmem:[%s251 + $0xc0] sm:$0xff]
      %v286 = vld [vmem:[%s251 + $0xc8] sm:$0xff]
      %v287 = vld [vmem:[%s251 + $0xd0] sm:$0xff]
      %v288 = vld [vmem:[%s251 + $0xd8] sm:$0xff]
      %v289 = vld [vmem:[%s251 + $0xe0] sm:$0xff]
      %v290 = vld [vmem:[%s251 + $0xe8] sm:$0xff]
      %v291 = vld [vmem:[%s251 + $0xf0] sm:$0xff]
      %v292 = vld [vmem:[%s251 + $0xf8] sm:$0xff]
      %v293 = vpack.c.bf16 %v263, %v261
      %v294 = vpack.c.bf16 %v264, %v262
      %v295 = vpack.c.bf16 %v267, %v265
      %v296 = vpack.c.bf16 %v268, %v266
      %v297 = vpack.c.bf16 %v271, %v269
      %v298 = vpack.c.bf16 %v272, %v270
      %v299 = vpack.c.bf16 %v275, %v273
      %v300 = vpack.c.bf16 %v276, %v274
      %v301 = vpack.c.bf16 %v279, %v277
      %v302 = vpack.c.bf16 %v280, %v278
      %v303 = vpack.c.bf16 %v283, %v281
      %v304 = vpack.c.bf16 %v284, %v282
      %v305 = vpack.c.bf16 %v287, %v285
      %v306 = vpack.c.bf16 %v288, %v286
      %v307 = vpack.c.bf16 %v291, %v289
      %v308 = vpack.c.bf16 %v292, %v290
      %v309 = vld [vmem:[%s1] sm:$0xf]
      %v310 = vld [vmem:[%s1 + $0x4] sm:$0xf]
      %v311 = vld [vmem:[%s1 + $0x8] sm:$0xf]
      %v312 = vld [vmem:[%s1 + $0xc] sm:$0xf]
      %v313 = vld [vmem:[%s1 + $0x10] sm:$0xf]
      %v314 = vld [vmem:[%s1 + $0x14] sm:$0xf]
      %v315 = vld [vmem:[%s1 + $0x18] sm:$0xf]
      %v316 = vld [vmem:[%s1 + $0x1c] sm:$0xf]
      %v317 = vld [vmem:[%s1 + $0x20] sm:$0xf]
      %v318 = vld [vmem:[%s1 + $0x24] sm:$0xf]
      %v319 = vld [vmem:[%s1 + $0x28] sm:$0xf]
      %v320 = vld [vmem:[%s1 + $0x2c] sm:$0xf]
      %v321 = vld [vmem:[%s1 + $0x30] sm:$0xf]
      %v322 = vld [vmem:[%s1 + $0x34] sm:$0xf]
      %v323 = vld [vmem:[%s1 + $0x38] sm:$0xf]
      %v324 = vld [vmem:[%s1 + $0x3c] sm:$0xf]
      %v325 = vld [vmem:[%s1 + $0x40] sm:$0xf]
      %v326 = vld [vmem:[%s1 + $0x44] sm:$0xf]
      %v327 = vld [vmem:[%s1 + $0x48] sm:$0xf]
      %v328 = vld [vmem:[%s1 + $0x4c] sm:$0xf]
      %v329 = vld [vmem:[%s1 + $0x50] sm:$0xf]
      %v330 = vld [vmem:[%s1 + $0x54] sm:$0xf]
      %v331 = vld [vmem:[%s1 + $0x58] sm:$0xf]
      %v332 = vld [vmem:[%s1 + $0x5c] sm:$0xf]
      %v333 = vld [vmem:[%s1 + $0x60] sm:$0xf]
      %v334 = vld [vmem:[%s1 + $0x64] sm:$0xf]
      %v335 = vld [vmem:[%s1 + $0x68] sm:$0xf]
      %v336 = vld [vmem:[%s1 + $0x6c] sm:$0xf]
      %v337 = vld [vmem:[%s1 + $0x70] sm:$0xf]
      %v338 = vld [vmem:[%s1 + $0x74] sm:$0xf]
      %v339 = vld [vmem:[%s1 + $0x78] sm:$0xf]
      %v340 = vld [vmem:[%s1 + $0x7c] sm:$0xf]
      %v373 = vunpack.c.l.b16 %v309
      %v374 = vunpack.c.l.b16 %v310
      %v375 = vunpack.c.l.b16 %v311
      %v376 = vunpack.c.l.b16 %v312
      %v377 = vunpack.c.l.b16 %v313
      %v378 = vunpack.c.l.b16 %v314
      %v379 = vunpack.c.l.b16 %v315
      %v380 = vunpack.c.l.b16 %v316
      %v381 = vunpack.c.l.b16 %v317
      %v382 = vunpack.c.l.b16 %v318
      %v383 = vunpack.c.l.b16 %v319
      %v384 = vunpack.c.l.b16 %v320
      %v385 = vunpack.c.l.b16 %v321
      %v386 = vunpack.c.l.b16 %v322
      %v387 = vunpack.c.l.b16 %v323
      %v388 = vunpack.c.l.b16 %v324
      %v389 = vunpack.c.l.b16 %v325
      %v390 = vunpack.c.l.b16 %v326
      %v391 = vunpack.c.l.b16 %v327
      %v392 = vunpack.c.l.b16 %v328
      %v393 = vunpack.c.l.b16 %v329
      %v394 = vunpack.c.l.b16 %v330
      %v395 = vunpack.c.l.b16 %v331
      %v396 = vunpack.c.l.b16 %v332
      %v397 = vunpack.c.l.b16 %v333
      %v398 = vunpack.c.l.b16 %v334
      %v399 = vunpack.c.l.b16 %v335
      %v400 = vunpack.c.l.b16 %v336
      %v401 = vunpack.c.l.b16 %v337
      %v402 = vunpack.c.l.b16 %v338
      %v403 = vunpack.c.l.b16 %v339
      %v404 = vunpack.c.l.b16 %v340
      %v405 = vpack.c.b16 %v374, %v373
      %v406 = vpack.c.b16 %v376, %v375
      %v407 = vpack.c.b16 %v378, %v377
      %v408 = vpack.c.b16 %v380, %v379
      %v409 = vpack.c.b16 %v382, %v381
      %v410 = vpack.c.b16 %v384, %v383
      %v411 = vpack.c.b16 %v386, %v385
      %v412 = vpack.c.b16 %v388, %v387
      %v413 = vpack.c.b16 %v390, %v389
      %v414 = vpack.c.b16 %v392, %v391
      %v415 = vpack.c.b16 %v394, %v393
      %v416 = vpack.c.b16 %v396, %v395
      %v417 = vpack.c.b16 %v398, %v397
      %v418 = vpack.c.b16 %v400, %v399
      %v419 = vpack.c.b16 %v402, %v401
      %v420 = vpack.c.b16 %v404, %v403
      %437 = vmatprep.subr.bf16.mxu0 0
      %438 = vmatpush1.bf16.msra.mxu0 %v405
      %439 = vmatprep.subr.bf16.mxu0 0
      %440 = vmatpush1.bf16.msra.mxu0 %v406
      %441 = vmatprep.subr.bf16.mxu0 0
      %442 = vmatpush1.bf16.msra.mxu0 %v407
      %443 = vmatprep.subr.bf16.mxu0 0
      %444 = vmatpush1.bf16.msra.mxu0 %v408
      %445 = vmatprep.subr.bf16.mxu0 0
      %446 = vmatpush1.bf16.msra.mxu0 %v409
      %447 = vmatprep.subr.bf16.mxu0 0
      %448 = vmatpush1.bf16.msra.mxu0 %v410
      %449 = vmatprep.subr.bf16.mxu0 0
      %450 = vmatpush1.bf16.msra.mxu0 %v411
      %451 = vmatprep.subr.bf16.mxu0 0
      %452 = vmatpush1.bf16.msra.mxu0 %v412
      %453 = vmatprep.subr.bf16.mxu0 0
      %454 = vmatpush1.bf16.msra.mxu0 %v413
      %455 = vmatprep.subr.bf16.mxu0 0
      %456 = vmatpush1.bf16.msra.mxu0 %v414
      %457 = vmatprep.subr.bf16.mxu0 0
      %458 = vmatpush1.bf16.msra.mxu0 %v415
      %459 = vmatprep.subr.bf16.mxu0 0
      %460 = vmatpush1.bf16.msra.mxu0 %v416
      %461 = vmatprep.subr.bf16.mxu0 0
      %462 = vmatpush1.bf16.msra.mxu0 %v417
      %463 = vmatprep.subr.bf16.mxu0 0
      %464 = vmatpush1.bf16.msra.mxu0 %v418
      %465 = vmatprep.subr.bf16.mxu0 0
      %466 = vmatpush1.bf16.msra.mxu0 %v419
      %467 = vmatprep.subr.bf16.mxu0 0
      %468 = vmatpush1.bf16.msra.mxu0 %v420
      %469 = vmatprep.mubr.bf16.mxu0 %v294
      %470 = vmatmul.mubr.bf16.gmra.mrb[0].mxu0 %v293
      %v471 = vpop.f32.mrb[0].mxu0
      %v472 = vadd.f32 0.0, %v471
      %v473 = vpop.f32.mrb[0].mxu0
      %v474 = vpop.f32.mrb[0].mxu0
      %v475 = vadd.f32 0.0, %v474
      %v476 = vpop.f32.mrb[0].mxu0
      %477 = vmatprep.mubr.bf16.mxu0 %v296
      %478 = vmatmul.mubr.bf16.gmra.mrb[0].mxu0 %v295
      %v479 = vpop.f32.mrb[0].mxu0
      %v480 = vadd.f32 0.0, %v479
      %v481 = vpop.f32.mrb[0].mxu0
      %v482 = vpop.f32.mrb[0].mxu0
      %v483 = vadd.f32 0.0, %v482
      %v484 = vpop.f32.mrb[0].mxu0
      %485 = vmatprep.mubr.bf16.mxu0 %v298
      %486 = vmatmul.mubr.bf16.gmra.mrb[0].mxu0 %v297
      %v487 = vpop.f32.mrb[0].mxu0
      %v488 = vadd.f32 0.0, %v487
      %v489 = vpop.f32.mrb[0].mxu0
      %v490 = vpop.f32.mrb[0].mxu0
      %v491 = vadd.f32 0.0, %v490
      %v492 = vpop.f32.mrb[0].mxu0
      %493 = vmatprep.mubr.bf16.mxu0 %v300
      %494 = vmatmul.mubr.bf16.gmra.mrb[0].mxu0 %v299
      %v495 = vpop.f32.mrb[0].mxu0
      %v496 = vadd.f32 0.0, %v495
      %v497 = vpop.f32.mrb[0].mxu0
      %v498 = vpop.f32.mrb[0].mxu0
      %v499 = vadd.f32 0.0, %v498
      %v500 = vpop.f32.mrb[0].mxu0
      %501 = vmatprep.mubr.bf16.mxu0 %v302
      %502 = vmatmul.mubr.bf16.gmra.mrb[0].mxu0 %v301
      %v503 = vpop.f32.mrb[0].mxu0
      %v504 = vadd.f32 0.0, %v503
      %v505 = vpop.f32.mrb[0].mxu0
      %v506 = vpop.f32.mrb[0].mxu0
      %v507 = vadd.f32 0.0, %v506
      %v508 = vpop.f32.mrb[0].mxu0
      %509 = vmatprep.mubr.bf16.mxu0 %v304
      %510 = vmatmul.mubr.bf16.gmra.mrb[0].mxu0 %v303
      %v511 = vpop.f32.mrb[0].mxu0
      %v512 = vadd.f32 0.0, %v511
      %v513 = vpop.f32.mrb[0].mxu0
      %v514 = vpop.f32.mrb[0].mxu0
      %v515 = vadd.f32 0.0, %v514
      %v516 = vpop.f32.mrb[0].mxu0
      %517 = vmatprep.mubr.bf16.mxu0 %v306
      %518 = vmatmul.mubr.bf16.gmra.mrb[0].mxu0 %v305
      %v519 = vpop.f32.mrb[0].mxu0
      %v520 = vadd.f32 0.0, %v519
      %v521 = vpop.f32.mrb[0].mxu0
      %v522 = vpop.f32.mrb[0].mxu0
      %v523 = vadd.f32 0.0, %v522
      %v524 = vpop.f32.mrb[0].mxu0
      %525 = vmatprep.mubr.bf16.mxu0 %v308
      %526 = vmatmul.mubr.bf16.gmra.mrb[0].mxu0 %v307
      %v527 = vpop.f32.mrb[0].mxu0
      %v528 = vadd.f32 0.0, %v527
      %v529 = vpop.f32.mrb[0].mxu0
      %v530 = vpop.f32.mrb[0].mxu0
      %v531 = vadd.f32 0.0, %v530
      %v532 = vpop.f32.mrb[0].mxu0
      %533 = vdwg.mxu0
      %v534 = vand.u32 2147483647, %v472
      %v535 = vand.u32 2147483647, %v475
      %v536 = vand.u32 2147483647, %v480
      %v537 = vand.u32 2147483647, %v483
      %v538 = vand.u32 2147483647, %v488
      %v539 = vand.u32 2147483647, %v491
      %v540 = vand.u32 2147483647, %v496
      %v541 = vand.u32 2147483647, %v499
      %v542 = vand.u32 2147483647, %v504
      %v543 = vand.u32 2147483647, %v507
      %v544 = vand.u32 2147483647, %v512
      %v545 = vand.u32 2147483647, %v515
      %v546 = vand.u32 2147483647, %v520
      %v547 = vand.u32 2147483647, %v523
      %v548 = vand.u32 2147483647, %v528
      %v549 = vand.u32 2147483647, %v531
      %v550 = vadd.f32 %v534, 1.0
      %v551 = vadd.f32 %v535, 1.0
      %v552 = vadd.f32 %v536, 1.0
      %v553 = vadd.f32 %v537, 1.0
      %v554 = vadd.f32 %v538, 1.0
      %v555 = vadd.f32 %v539, 1.0
      %v556 = vadd.f32 %v540, 1.0
      %v557 = vadd.f32 %v541, 1.0
      %v558 = vadd.f32 %v542, 1.0
      %v559 = vadd.f32 %v543, 1.0
      %v560 = vadd.f32 %v544, 1.0
      %v561 = vadd.f32 %v545, 1.0
      %v562 = vadd.f32 %v546, 1.0
      %v563 = vadd.f32 %v547, 1.0
      %v564 = vadd.f32 %v548, 1.0
      %v565 = vadd.f32 %v549, 1.0
      %v566 = vlog2.pop %v550
      %v567 = vmul.f32 %v566, 0.6931472
      %v568 = vlog2.pop %v551
      %v569 = vmul.f32 %v568, 0.6931472
      %v570 = vlog2.pop %v552
      %v571 = vmul.f32 %v570, 0.6931472
      %v572 = vlog2.pop %v553
      %v573 = vmul.f32 %v572, 0.6931472
      %v574 = vlog2.pop %v554
      %v575 = vmul.f32 %v574, 0.6931472
      %v576 = vlog2.pop %v555
      %v577 = vmul.f32 %v576, 0.6931472
      %v578 = vlog2.pop %v556
      %v579 = vmul.f32 %v578, 0.6931472
      %v580 = vlog2.pop %v557
      %v581 = vmul.f32 %v580, 0.6931472
      %v582 = vlog2.pop %v558
      %v583 = vmul.f32 %v582, 0.6931472
      %v584 = vlog2.pop %v559
      %v585 = vmul.f32 %v584, 0.6931472
      %v586 = vlog2.pop %v560
      %v587 = vmul.f32 %v586, 0.6931472
      %v588 = vlog2.pop %v561
      %v589 = vmul.f32 %v588, 0.6931472
      %v590 = vlog2.pop %v562
      %v591 = vmul.f32 %v590, 0.6931472
      %v592 = vlog2.pop %v563
      %v593 = vmul.f32 %v592, 0.6931472
      %v594 = vlog2.pop %v564
      %v595 = vmul.f32 %v594, 0.6931472
      %v596 = vlog2.pop %v565
      %v597 = vmul.f32 %v596, 0.6931472
      %v598 = vpack.c.bf16 %v569, %v567
      %v599 = vpack.c.bf16 %v573, %v571
      %v600 = vpack.c.bf16 %v577, %v575
      %v601 = vpack.c.bf16 %v581, %v579
      %v602 = vpack.c.bf16 %v585, %v583
      %v603 = vpack.c.bf16 %v589, %v587
      %v604 = vpack.c.bf16 %v593, %v591
      %v605 = vpack.c.bf16 %v597, %v595
      %v606 = vld [vmem:[%s2] sm:$0xf]
      %v607 = vld [vmem:[%s2 + $0x4] sm:$0xf]
      %v608 = vld [vmem:[%s2 + $0x8] sm:$0xf]
      %v609 = vld [vmem:[%s2 + $0xc] sm:$0xf]
      %v610 = vld [vmem:[%s2 + $0x10] sm:$0xf]
      %v611 = vld [vmem:[%s2 + $0x14] sm:$0xf]
      %v612 = vld [vmem:[%s2 + $0x18] sm:$0xf]
      %v613 = vld [vmem:[%s2 + $0x1c] sm:$0xf]
      %v614 = vld [vmem:[%s2 + $0x20] sm:$0xf]
      %v615 = vld [vmem:[%s2 + $0x24] sm:$0xf]
      %v616 = vld [vmem:[%s2 + $0x28] sm:$0xf]
      %v617 = vld [vmem:[%s2 + $0x2c] sm:$0xf]
      %v618 = vld [vmem:[%s2 + $0x30] sm:$0xf]
      %v619 = vld [vmem:[%s2 + $0x34] sm:$0xf]
      %v620 = vld [vmem:[%s2 + $0x38] sm:$0xf]
      %v621 = vld [vmem:[%s2 + $0x3c] sm:$0xf]
      %v622 = vld [vmem:[%s3] sm:$0x1]
      %v624 = vlaneseq
      %v625 = vshrl.u32 %v624, 7
      %v626 = vsub.s32 0, %v625
      %v627 = vrot.slane %v622, %v626
      %v645 = vunpack.c.l.b16 %v606
      %v646 = vunpack.c.l.b16 %v607
      %v647 = vunpack.c.l.b16 %v608
      %v648 = vunpack.c.l.b16 %v609
      %v649 = vunpack.c.l.b16 %v610
      %v650 = vunpack.c.l.b16 %v611
      %v651 = vunpack.c.l.b16 %v612
      %v652 = vunpack.c.l.b16 %v613
      %v653 = vunpack.c.l.b16 %v614
      %v654 = vunpack.c.l.b16 %v615
      %v655 = vunpack.c.l.b16 %v616
      %v656 = vunpack.c.l.b16 %v617
      %v657 = vunpack.c.l.b16 %v618
      %v658 = vunpack.c.l.b16 %v619
      %v659 = vunpack.c.l.b16 %v620
      %v660 = vunpack.c.l.b16 %v621
      %v661 = vpack.c.b16 %v646, %v645
      %v662 = vpack.c.b16 %v648, %v647
      %v663 = vpack.c.b16 %v650, %v649
      %v664 = vpack.c.b16 %v652, %v651
      %v665 = vpack.c.b16 %v654, %v653
      %v666 = vpack.c.b16 %v656, %v655
      %v667 = vpack.c.b16 %v658, %v657
      %v668 = vpack.c.b16 %v660, %v659
      %677 = vmatprep.subr.bf16.mxu0 0
      %678 = vmatpush1.bf16.msra.mxu0 %v661
      %679 = vmatprep.subr.bf16.mxu0 0
      %680 = vmatpush1.bf16.msra.mxu0 %v662
      %681 = vmatprep.subr.bf16.mxu0 0
      %682 = vmatpush1.bf16.msra.mxu0 %v663
      %683 = vmatprep.subr.bf16.mxu0 0
      %684 = vmatpush1.bf16.msra.mxu0 %v664
      %685 = vmatprep.subr.bf16.mxu0 0
      %686 = vmatpush1.bf16.msra.mxu0 %v665
      %687 = vmatprep.subr.bf16.mxu0 0
      %688 = vmatpush1.bf16.msra.mxu0 %v666
      %689 = vmatprep.subr.bf16.mxu0 0
      %690 = vmatpush1.bf16.msra.mxu0 %v667
      %691 = vmatprep.subr.bf16.mxu0 0
      %692 = vmatpush1.bf16.msra.mxu0 %v668
      %693 = vmatprep.subr.bf16.mxu0 0
      %694 = vmatpush1.bf16.msra.mxu0 0
      %695 = vmatprep.subr.bf16.mxu0 0
      %696 = vmatpush1.bf16.msra.mxu0 0
      %697 = vmatprep.subr.bf16.mxu0 0
      %698 = vmatpush1.bf16.msra.mxu0 0
      %699 = vmatprep.subr.bf16.mxu0 0
      %700 = vmatpush1.bf16.msra.mxu0 0
      %701 = vmatprep.subr.bf16.mxu0 0
      %702 = vmatpush1.bf16.msra.mxu0 0
      %703 = vmatprep.subr.bf16.mxu0 0
      %704 = vmatpush1.bf16.msra.mxu0 0
      %705 = vmatprep.subr.bf16.mxu0 0
      %706 = vmatpush1.bf16.msra.mxu0 0
      %707 = vmatprep.subr.bf16.mxu0 0
      %708 = vmatpush1.bf16.msra.mxu0 0
      %709 = vmatprep.mubr.bf16.mxu0 0
      %710 = vmatmul.mubr.bf16.gmra.mrb[0].mxu0 %v598
      %v711 = vpop.f32.mrb[0].mxu0
      %v712 = vadd.f32 %v627, %v711
      %v713 = vpop.f32.mrb[0].mxu0
      %v714 = vpop.f32.mrb[0].mxu0
      %v715 = vadd.f32 %v627, %v714
      %v716 = vpop.f32.mrb[0].mxu0
      %717 = vmatprep.mubr.bf16.mxu0 0
      %718 = vmatmul.mubr.bf16.gmra.mrb[0].mxu0 %v599
      %v719 = vpop.f32.mrb[0].mxu0
      %v720 = vadd.f32 %v627, %v719
      %v721 = vpop.f32.mrb[0].mxu0
      %v722 = vpop.f32.mrb[0].mxu0
      %v723 = vadd.f32 %v627, %v722
      %v724 = vpop.f32.mrb[0].mxu0
      %725 = vmatprep.mubr.bf16.mxu0 0
      %726 = vmatmul.mubr.bf16.gmra.mrb[0].mxu0 %v600
      %v727 = vpop.f32.mrb[0].mxu0
      %v728 = vadd.f32 %v627, %v727
      %v729 = vpop.f32.mrb[0].mxu0
      %v730 = vpop.f32.mrb[0].mxu0
      %v731 = vadd.f32 %v627, %v730
      %v732 = vpop.f32.mrb[0].mxu0
      %733 = vmatprep.mubr.bf16.mxu0 0
      %734 = vmatmul.mubr.bf16.gmra.mrb[0].mxu0 %v601
      %v735 = vpop.f32.mrb[0].mxu0
      %v736 = vadd.f32 %v627, %v735
      %v737 = vpop.f32.mrb[0].mxu0
      %v738 = vpop.f32.mrb[0].mxu0
      %v739 = vadd.f32 %v627, %v738
      %v740 = vpop.f32.mrb[0].mxu0
      %741 = vmatprep.mubr.bf16.mxu0 0
      %742 = vmatmul.mubr.bf16.gmra.mrb[0].mxu0 %v602
      %v743 = vpop.f32.mrb[0].mxu0
      %v744 = vadd.f32 %v627, %v743
      %v745 = vpop.f32.mrb[0].mxu0
      %v746 = vpop.f32.mrb[0].mxu0
      %v747 = vadd.f32 %v627, %v746
      %v748 = vpop.f32.mrb[0].mxu0
      %749 = vmatprep.mubr.bf16.mxu0 0
      %750 = vmatmul.mubr.bf16.gmra.mrb[0].mxu0 %v603
      %v751 = vpop.f32.mrb[0].mxu0
      %v752 = vadd.f32 %v627, %v751
      %v753 = vpop.f32.mrb[0].mxu0
      %v754 = vpop.f32.mrb[0].mxu0
      %v755 = vadd.f32 %v627, %v754
      %v756 = vpop.f32.mrb[0].mxu0
      %757 = vmatprep.mubr.bf16.mxu0 0
      %758 = vmatmul.mubr.bf16.gmra.mrb[0].mxu0 %v604
      %v759 = vpop.f32.mrb[0].mxu0
      %v760 = vadd.f32 %v627, %v759
      %v761 = vpop.f32.mrb[0].mxu0
      %v762 = vpop.f32.mrb[0].mxu0
      %v763 = vadd.f32 %v627, %v762
      %v764 = vpop.f32.mrb[0].mxu0
      %765 = vmatprep.mubr.bf16.mxu0 0
      %766 = vmatmul.mubr.bf16.gmra.mrb[0].mxu0 %v605
      %v767 = vpop.f32.mrb[0].mxu0
      %v768 = vadd.f32 %v627, %v767
      %v769 = vpop.f32.mrb[0].mxu0
      %v770 = vpop.f32.mrb[0].mxu0
      %v771 = vadd.f32 %v627, %v770
      %v772 = vpop.f32.mrb[0].mxu0
      %773 = vdwg.mxu0
      %v774 = vtanh.pop %v712
      %v775 = vtanh.pop %v715
      %v776 = vtanh.pop %v720
      %v777 = vtanh.pop %v723
      %v778 = vtanh.pop %v728
      %v779 = vtanh.pop %v731
      %v780 = vtanh.pop %v736
      %v781 = vtanh.pop %v739
      %v782 = vtanh.pop %v744
      %v783 = vtanh.pop %v747
      %v784 = vtanh.pop %v752
      %v785 = vtanh.pop %v755
      %v786 = vtanh.pop %v760
      %v787 = vtanh.pop %v763
      %v788 = vtanh.pop %v768
      %v789 = vtanh.pop %v771
      %v790 = vpack.c.bf16 %v775, %v774
      %v791 = vpack.c.bf16 %v777, %v776
      %v792 = vpack.c.bf16 %v779, %v778
      %v793 = vpack.c.bf16 %v781, %v780
      %v794 = vpack.c.bf16 %v783, %v782
      %v795 = vpack.c.bf16 %v785, %v784
      %v796 = vpack.c.bf16 %v787, %v786
      %v797 = vpack.c.bf16 %v789, %v788
      %v798 = vld [vmem:[%s4] sm:$0xff]
      %v799 = vld [vmem:[%s4 + $0x8] sm:$0xff]
      %v800 = vld [vmem:[%s4 + $0x10] sm:$0xff]
      %v801 = vld [vmem:[%s4 + $0x18] sm:$0xff]
      %v802 = vld [vmem:[%s4 + $0x20] sm:$0xff]
      %v803 = vld [vmem:[%s4 + $0x28] sm:$0xff]
      %v804 = vld [vmem:[%s4 + $0x30] sm:$0xff]
      %v805 = vld [vmem:[%s4 + $0x38] sm:$0xff]
      %v806 = vld [vmem:[%s4 + $0x40] sm:$0xff]
      %v807 = vld [vmem:[%s4 + $0x48] sm:$0xff]
      %v808 = vld [vmem:[%s4 + $0x50] sm:$0xff]
      %v809 = vld [vmem:[%s4 + $0x58] sm:$0xff]
      %v810 = vld [vmem:[%s4 + $0x60] sm:$0xff]
      %v811 = vld [vmem:[%s4 + $0x68] sm:$0xff]
      %v812 = vld [vmem:[%s4 + $0x70] sm:$0xff]
      %v813 = vld [vmem:[%s4 + $0x78] sm:$0xff]
      %v814 = vld [vmem:[%s5] sm:$0x3]
      %v816 = vlaneseq
      %v817 = vshrl.u32 %v816, 7
      %v818 = vsub.s32 0, %v817
      %v819 = vrot.slane %v814, %v818
      %v820 = vlaneseq
      %v821 = vshrl.u32 %v820, 7
      %v822 = vsub.s32 1, %v821
      %v823 = vrot.slane %v814, %v822
      %v842 = vunpack.c.l.b16 %v798
      %v843 = vunpack.c.h.b16 %v798
      %v844 = vunpack.c.l.b16 %v799
      %v845 = vunpack.c.h.b16 %v799
      %v846 = vunpack.c.l.b16 %v800
      %v847 = vunpack.c.h.b16 %v800
      %v848 = vunpack.c.l.b16 %v801
      %v849 = vunpack.c.h.b16 %v801
      %v850 = vunpack.c.l.b16 %v802
      %v851 = vunpack.c.h.b16 %v802
      %v852 = vunpack.c.l.b16 %v803
      %v853 = vunpack.c.h.b16 %v803
      %v854 = vunpack.c.l.b16 %v804
      %v855 = vunpack.c.h.b16 %v804
      %v856 = vunpack.c.l.b16 %v805
      %v857 = vunpack.c.h.b16 %v805
      %v858 = vunpack.c.l.b16 %v806
      %v859 = vunpack.c.h.b16 %v806
      %v860 = vunpack.c.l.b16 %v807
      %v861 = vunpack.c.h.b16 %v807
      %v862 = vunpack.c.l.b16 %v808
      %v863 = vunpack.c.h.b16 %v808
      %v864 = vunpack.c.l.b16 %v809
      %v865 = vunpack.c.h.b16 %v809
      %v866 = vunpack.c.l.b16 %v810
      %v867 = vunpack.c.h.b16 %v810
      %v868 = vunpack.c.l.b16 %v811
      %v869 = vunpack.c.h.b16 %v811
      %v870 = vunpack.c.l.b16 %v812
      %v871 = vunpack.c.h.b16 %v812
      %v872 = vunpack.c.l.b16 %v813
      %v873 = vunpack.c.h.b16 %v813
      %v874 = vpack.c.b16 %v844, %v842
      %v875 = vpack.c.b16 %v845, %v843
      %v876 = vpack.c.b16 %v848, %v846
      %v877 = vpack.c.b16 %v849, %v847
      %v878 = vpack.c.b16 %v852, %v850
      %v879 = vpack.c.b16 %v853, %v851
      %v880 = vpack.c.b16 %v856, %v854
      %v881 = vpack.c.b16 %v857, %v855
      %v882 = vpack.c.b16 %v860, %v858
      %v883 = vpack.c.b16 %v861, %v859
      %v884 = vpack.c.b16 %v864, %v862
      %v885 = vpack.c.b16 %v865, %v863
      %v886 = vpack.c.b16 %v868, %v866
      %v887 = vpack.c.b16 %v869, %v867
      %v888 = vpack.c.b16 %v872, %v870
      %v889 = vpack.c.b16 %v873, %v871
      %906 = vmatprep.subr.bf16.mxu0 %v875
      %907 = vmatpush1.bf16.msra.mxu0 %v874
      %908 = vmatprep.subr.bf16.mxu0 %v877
      %909 = vmatpush1.bf16.msra.mxu0 %v876
      %910 = vmatprep.subr.bf16.mxu0 %v879
      %911 = vmatpush1.bf16.msra.mxu0 %v878
      %912 = vmatprep.subr.bf16.mxu0 %v881
      %913 = vmatpush1.bf16.msra.mxu0 %v880
      %914 = vmatprep.subr.bf16.mxu0 %v883
      %915 = vmatpush1.bf16.msra.mxu0 %v882
      %916 = vmatprep.subr.bf16.mxu0 %v885
      %917 = vmatpush1.bf16.msra.mxu0 %v884
      %918 = vmatprep.subr.bf16.mxu0 %v887
      %919 = vmatpush1.bf16.msra.mxu0 %v886
      %920 = vmatprep.subr.bf16.mxu0 %v889
      %921 = vmatpush1.bf16.msra.mxu0 %v888
      %922 = vmatprep.subr.bf16.mxu0 0
      %923 = vmatpush1.bf16.msra.mxu0 0
      %924 = vmatprep.subr.bf16.mxu0 0
      %925 = vmatpush1.bf16.msra.mxu0 0
      %926 = vmatprep.subr.bf16.mxu0 0
      %927 = vmatpush1.bf16.msra.mxu0 0
      %928 = vmatprep.subr.bf16.mxu0 0
      %929 = vmatpush1.bf16.msra.mxu0 0
      %930 = vmatprep.subr.bf16.mxu0 0
      %931 = vmatpush1.bf16.msra.mxu0 0
      %932 = vmatprep.subr.bf16.mxu0 0
      %933 = vmatpush1.bf16.msra.mxu0 0
      %934 = vmatprep.subr.bf16.mxu0 0
      %935 = vmatpush1.bf16.msra.mxu0 0
      %936 = vmatprep.subr.bf16.mxu0 0
      %937 = vmatpush1.bf16.msra.mxu0 0
      %938 = vmatprep.mubr.bf16.mxu0 0
      %939 = vmatmul.mubr.bf16.gmra.mrb[0].mxu0 %v790
      %v940 = vpop.f32.mrb[0].mxu0
      %v941 = vadd.f32 %v819, %v940
      %v942 = vpop.f32.mrb[0].mxu0
      %v943 = vadd.f32 %v823, %v942
      %v944 = vpop.f32.mrb[0].mxu0
      %v945 = vadd.f32 %v819, %v944
      %v946 = vpop.f32.mrb[0].mxu0
      %v947 = vadd.f32 %v823, %v946
      %948 = vmatprep.mubr.bf16.mxu0 0
      %949 = vmatmul.mubr.bf16.gmra.mrb[0].mxu0 %v791
      %v950 = vpop.f32.mrb[0].mxu0
      %v951 = vadd.f32 %v819, %v950
      %v952 = vpop.f32.mrb[0].mxu0
      %v953 = vadd.f32 %v823, %v952
      %v954 = vpop.f32.mrb[0].mxu0
      %v955 = vadd.f32 %v819, %v954
      %v956 = vpop.f32.mrb[0].mxu0
      %v957 = vadd.f32 %v823, %v956
      %958 = vmatprep.mubr.bf16.mxu0 0
      %959 = vmatmul.mubr.bf16.gmra.mrb[0].mxu0 %v792
      %v960 = vpop.f32.mrb[0].mxu0
      %v961 = vadd.f32 %v819, %v960
      %v962 = vpop.f32.mrb[0].mxu0
      %v963 = vadd.f32 %v823, %v962
      %v964 = vpop.f32.mrb[0].mxu0
      %v965 = vadd.f32 %v819, %v964
      %v966 = vpop.f32.mrb[0].mxu0
      %v967 = vadd.f32 %v823, %v966
      %968 = vmatprep.mubr.bf16.mxu0 0
      %969 = vmatmul.mubr.bf16.gmra.mrb[0].mxu0 %v793
      %v970 = vpop.f32.mrb[0].mxu0
      %v971 = vadd.f32 %v819, %v970
      %v972 = vpop.f32.mrb[0].mxu0
      %v973 = vadd.f32 %v823, %v972
      %v974 = vpop.f32.mrb[0].mxu0
      %v975 = vadd.f32 %v819, %v974
      %v976 = vpop.f32.mrb[0].mxu0
      %v977 = vadd.f32 %v823, %v976
      %978 = vmatprep.mubr.bf16.mxu0 0
      %979 = vmatmul.mubr.bf16.gmra.mrb[0].mxu0 %v794
      %v980 = vpop.f32.mrb[0].mxu0
      %v981 = vadd.f32 %v819, %v980
      %v982 = vpop.f32.mrb[0].mxu0
      %v983 = vadd.f32 %v823, %v982
      %v984 = vpop.f32.mrb[0].mxu0
      %v985 = vadd.f32 %v819, %v984
      %v986 = vpop.f32.mrb[0].mxu0
      %v987 = vadd.f32 %v823, %v986
      %988 = vmatprep.mubr.bf16.mxu0 0
      %989 = vmatmul.mubr.bf16.gmra.mrb[0].mxu0 %v795
      %v990 = vpop.f32.mrb[0].mxu0
      %v991 = vadd.f32 %v819, %v990
      %v992 = vpop.f32.mrb[0].mxu0
      %v993 = vadd.f32 %v823, %v992
      %v994 = vpop.f32.mrb[0].mxu0
      %v995 = vadd.f32 %v819, %v994
      %v996 = vpop.f32.mrb[0].mxu0
      %v997 = vadd.f32 %v823, %v996
      %998 = vmatprep.mubr.bf16.mxu0 0
      %999 = vmatmul.mubr.bf16.gmra.mrb[0].mxu0 %v796
      %v1000 = vpop.f32.mrb[0].mxu0
      %v1001 = vadd.f32 %v819, %v1000
      %v1002 = vpop.f32.mrb[0].mxu0
      %v1003 = vadd.f32 %v823, %v1002
      %v1004 = vpop.f32.mrb[0].mxu0
      %v1005 = vadd.f32 %v819, %v1004
      %v1006 = vpop.f32.mrb[0].mxu0
      %v1007 = vadd.f32 %v823, %v1006
      %1008 = vmatprep.mubr.bf16.mxu0 0
      %1009 = vmatmul.mubr.bf16.gmra.mrb[0].mxu0 %v797
      %v1010 = vpop.f32.mrb[0].mxu0
      %v1011 = vadd.f32 %v819, %v1010
      %v1012 = vpop.f32.mrb[0].mxu0
      %v1013 = vadd.f32 %v823, %v1012
      %v1014 = vpop.f32.mrb[0].mxu0
      %v1015 = vadd.f32 %v819, %v1014
      %v1016 = vpop.f32.mrb[0].mxu0
      %v1017 = vadd.f32 %v823, %v1016
      %1018 = vdwg.mxu0
      %v1019 = vtanh.pop %v941
      %v1020 = vtanh.pop %v943
      %v1021 = vtanh.pop %v945
      %v1022 = vtanh.pop %v947
      %v1023 = vtanh.pop %v951
      %v1024 = vtanh.pop %v953
      %v1025 = vtanh.pop %v955
      %v1026 = vtanh.pop %v957
      %v1027 = vtanh.pop %v961
      %v1028 = vtanh.pop %v963
      %v1029 = vtanh.pop %v965
      %v1030 = vtanh.pop %v967
      %v1031 = vtanh.pop %v971
      %v1032 = vtanh.pop %v973
      %v1033 = vtanh.pop %v975
      %v1034 = vtanh.pop %v977
      %v1035 = vtanh.pop %v981
      %v1036 = vtanh.pop %v983
      %v1037 = vtanh.pop %v985
      %v1038 = vtanh.pop %v987
      %v1039 = vtanh.pop %v991
      %v1040 = vtanh.pop %v993
      %v1041 = vtanh.pop %v995
      %v1042 = vtanh.pop %v997
      %v1043 = vtanh.pop %v1001
      %v1044 = vtanh.pop %v1003
      %v1045 = vtanh.pop %v1005
      %v1046 = vtanh.pop %v1007
      %v1047 = vtanh.pop %v1011
      %v1048 = vtanh.pop %v1013
      %v1049 = vtanh.pop %v1015
      %v1050 = vtanh.pop %v1017
      %1051 = vst [vmem:[%s258] sm:$0xff] %v1019
      %1052 = vst [vmem:[%s258 + $0x8] sm:$0xff] %v1020
      %1053 = vst [vmem:[%s258 + $0x10] sm:$0xff] %v1021
      %1054 = vst [vmem:[%s258 + $0x18] sm:$0xff] %v1022
      %1055 = vst [vmem:[%s258 + $0x20] sm:$0xff] %v1023
      %1056 = vst [vmem:[%s258 + $0x28] sm:$0xff] %v1024
      %1057 = vst [vmem:[%s258 + $0x30] sm:$0xff] %v1025
      %1058 = vst [vmem:[%s258 + $0x38] sm:$0xff] %v1026
      %1059 = vst [vmem:[%s258 + $0x40] sm:$0xff] %v1027
      %1060 = vst [vmem:[%s258 + $0x48] sm:$0xff] %v1028
      %1061 = vst [vmem:[%s258 + $0x50] sm:$0xff] %v1029
      %1062 = vst [vmem:[%s258 + $0x58] sm:$0xff] %v1030
      %1063 = vst [vmem:[%s258 + $0x60] sm:$0xff] %v1031
      %1064 = vst [vmem:[%s258 + $0x68] sm:$0xff] %v1032
      %1065 = vst [vmem:[%s258 + $0x70] sm:$0xff] %v1033
      %1066 = vst [vmem:[%s258 + $0x78] sm:$0xff] %v1034
      %1067 = vst [vmem:[%s258 + $0x80] sm:$0xff] %v1035
      %1068 = vst [vmem:[%s258 + $0x88] sm:$0xff] %v1036
      %1069 = vst [vmem:[%s258 + $0x90] sm:$0xff] %v1037
      %1070 = vst [vmem:[%s258 + $0x98] sm:$0xff] %v1038
      %1071 = vst [vmem:[%s258 + $0xa0] sm:$0xff] %v1039
      %1072 = vst [vmem:[%s258 + $0xa8] sm:$0xff] %v1040
      %1073 = vst [vmem:[%s258 + $0xb0] sm:$0xff] %v1041
      %1074 = vst [vmem:[%s258 + $0xb8] sm:$0xff] %v1042
      %1075 = vst [vmem:[%s258 + $0xc0] sm:$0xff] %v1043
      %1076 = vst [vmem:[%s258 + $0xc8] sm:$0xff] %v1044
      %1077 = vst [vmem:[%s258 + $0xd0] sm:$0xff] %v1045
      %1078 = vst [vmem:[%s258 + $0xd8] sm:$0xff] %v1046
      %1079 = vst [vmem:[%s258 + $0xe0] sm:$0xff] %v1047
      %1080 = vst [vmem:[%s258 + $0xe8] sm:$0xff] %v1048
      %1081 = vst [vmem:[%s258 + $0xf0] sm:$0xff] %v1049
      %1082 = vst [vmem:[%s258 + $0xf8] sm:$0xff] %v1050
      %s1083 = smul.u32 16, %s17
      %p1084 = scmp.lt.s32.totalorder %s1083, 31
      %s1085 = scalar_select %p1084, %s1083, 31
      %s1086 = smul.addr %s1085, 2
      %s1087 = smul.addr %s1086, 8
      %s1088 = scalar_lea.vmem %s6, %s1087
      // Predicated region
      $region45: #{_lambda_.1} parent=43 // pred_check
        %p1089 = pneg %p166
      $region46: #{_lambda_.1} parent=43 // pred_check_branch
        %1091 = sbr.rel (%p1089) target = $region48
      $region47: #{_lambda_.1} parent=43 // pred_region
        %s1092 = smul.u32 16, %s17
      $region48: #{_lambda_.1} parent=43 // pred_fallthru
        _
    $region44: #{_lambda_.1} parent=5 // pred_fallthru
      _
    %p1093 = scmp.le.s32.totalorder 2, %s12
    // Predicated region
    $region49: #{_lambda_.1} parent=5 // pred_check
      %p1094 = pneg %p1093
    $region50: #{_lambda_.1} parent=5 // pred_check_branch
      %1096 = sbr.rel (%p1094) target = $region52
    $region51: #{_lambda_.1} parent=5 // pred_region
      %s1097 = ssub.s32 %s12, 2
      // Predicated region
      $region53: #{_lambda_.1} parent=51 // pred_check
        %p1098 = pneg %p172
      $region54: #{_lambda_.1} parent=51 // pred_check_branch
        %1100 = sbr.rel (%p1098) target = $region56
      $region55: #{_lambda_.1} parent=51 // pred_region
        %s1101 = smul.u32 16, %s18
        %p1102 = scmp.lt.s32.totalorder %s1101, 31
        %s1103 = scalar_select %p1102, %s1101, 31
        %s1104 = smul.addr %s1103, 2
        %s1105 = smul.addr %s1104, 8
        %s1106 = scalar_lea.vmem %s6, %s1105
      $region56: #{_lambda_.1} parent=51 // pred_fallthru
        _
    $region52: #{_lambda_.1} parent=5 // pred_fallthru
      _
  $region6: #{_lambda_.1} parent=0 // loop_footer
    %s16 = sadd.s32 1, %s12
  $region7: #{_lambda_.1} parent=0 // loop_footer_branch
    %11 = sbr.rel target = $region3
  $region8: #{_lambda_.1} parent=0 // loop_exit
    _

</llo_original>
